<compile_context>
chip_gen: v7x
topology: tpu7x:2x2x1
jax: 0.10.0
libtpu: 0.0.40
codegen_flags: <defaults>
</compile_context>

<pallas_src>
import functools

import jax
import jax.numpy as jnp
from jax.experimental import pallas as pl
from jax.experimental.pallas import tpu as pltpu

_VMEM = pl.BlockSpec(memory_space=pltpu.MemorySpace.VMEM)
_LANE = 128  # TPU lane width


def _round_up(x, m):
    return ((x + m - 1) // m) * m


# ----------------------------------------------------------------------------
# Fused Pallas kernel: full Model forward
# ----------------------------------------------------------------------------
def fused_forward_pallas(x0, xfeat, w_in, w_conv, bias, graph, nu_pad):
    """Single fused pallas_call for the whole Model forward (6 packed inputs)."""
    n, h = x0.shape
    f_pad = w_in.shape[0]
    two_e = graph.shape[0] - n
    e_pad = two_e // 2
    f32, bf16 = jnp.float32, jnp.bfloat16

    def kernel(x0_ref, xfeat_ref, w_in_ref, w_conv_ref, bias_ref, graph_ref,
               out_ref):
        # ---- input encoders: movie Linear folded into the stacked layout ----
        # user rows of xfeat are zero, so the matmul only contributes to movies
        x = (x0_ref[...]
             + jnp.dot(xfeat_ref[...], w_in_ref[...],
                       preferred_element_type=f32)
             + bias_ref[0])                                     # (N, H) f32

        # node-type masks (user rows [0, nu_pad), movie rows after)
        row = jax.lax.broadcasted_iota(jnp.int32, (n, 1), 0)
        mask_u = (row < nu_pad).astype(f32)                     # (N, 1)
        mask_m = 1.0 - mask_u

        a = graph_ref[0:n, :]       # (N, N)   row-normalized block adjacency
        g = graph_ref[n:, :]        # (2E, N)  stacked one-hot edge gathers

        # ---- one hetero SAGE layer == 2 matmuls (block agg + K=4H conv) ----
        def layer(x, idx, relu):
            agg = jnp.dot(a, x.astype(bf16),
                          preferred_element_type=f32)           # (N, H)
            cat = jnp.concatenate(
                [agg * mask_u, x * mask_u, agg * mask_m, x * mask_m],
                axis=-1).astype(bf16)                           # (N, 4H)=128 lanes
            out = jnp.dot(cat, w_conv_ref[idx],
                          preferred_element_type=f32) + bias_ref[idx + 1]
            return jnp.maximum(out, 0.0) if relu else out

        x1 = layer(x, 0, True)      # hetero layer 1 (+ReLU)
        x2 = layer(x1, 1, False)    # hetero layer 2

        # ---- dot-product link classifier ----
        ef = jnp.dot(g, x2.astype(bf16),
                     preferred_element_type=f32)                # (2E, H)
        prod = ef[0:e_pad, :] * ef[e_pad:, :]                   # (E, H)
        # contract H via A @ B^T so the result is one lane-dense (1, E) row
        ones_row = jnp.ones((1, h), f32)
        out_ref[...] = jax.lax.dot_general(
            ones_row, prod, dimension_numbers=(((1,), (1,)), ((), ())),
            preferred_element_type=f32)

    flops = (2 * n * f_pad * h
             + 2 * (2 * n * n * h + 2 * n * (4 * h) * h)
             + 2 * two_e * n * h
             + 2 * e_pad * h)
    bytes_accessed = sum(int(t.size) * t.dtype.itemsize
                         for t in (x0, xfeat, w_in, w_conv, bias, graph)
                         ) + 4 * e_pad

    out = pl.pallas_call(
        kernel,
        out_shape=jax.ShapeDtypeStruct((1, e_pad), jnp.float32),
        in_specs=[_VMEM] * 6,
        out_specs=_VMEM,
        cost_estimate=pl.CostEstimate(flops=flops, transcendentals=0,
                                      bytes_accessed=bytes_accessed),
    )(x0, xfeat, w_in, w_conv, bias, graph)
    return out[0]                                               # (E_pad,)


# ----------------------------------------------------------------------------
# Static graph / parameter preprocessing (index plumbing, done once)
# ----------------------------------------------------------------------------
def build_mean_adj(dst_idx, src_idx, n_dst, n_src):
    """Row-normalized dense adjacency so A @ x_src == mean aggregation."""
    oh_dst = jax.nn.one_hot(dst_idx, n_dst, dtype=jnp.float32)   # (E, Nd)
    oh_src = jax.nn.one_hot(src_idx, n_src, dtype=jnp.float32)   # (E, Ns)
    counts = oh_dst.T @ oh_src                                    # (Nd, Ns)
    deg = jnp.clip(jnp.sum(counts, axis=1, keepdims=True), 1.0, None)
    return counts / deg


def precompute_graph(edge_index_u2m, edge_label_index,
                     num_users, num_movies, nu_pad, nm_pad, e_pad):
    """One packed (N + 2*E_pad, N) bf16 buffer: [A_blk ; G_user ; G_movie]."""
    del num_users, num_movies  # indices already fit into the padded blocks
    n = nu_pad + nm_pad
    # movie <- user  and  user <- movie (reverse) mean-normalized adjacencies
    a_u2m = build_mean_adj(edge_index_u2m[1], edge_index_u2m[0], nm_pad, nu_pad)
    a_m2u = build_mean_adj(edge_index_u2m[0], edge_index_u2m[1], nu_pad, nm_pad)
    top = jnp.concatenate([jnp.zeros((nu_pad, nu_pad), jnp.float32), a_m2u], 1)
    bot = jnp.concatenate([a_u2m, jnp.zeros((nm_pad, nm_pad), jnp.float32)], 1)
    a_blk = jnp.concatenate([top, bot], axis=0)                   # (N, N)

    e = edge_label_index.shape[1]
    g_u = jnp.pad(jax.nn.one_hot(edge_label_index[0], n, dtype=jnp.float32),
                  ((0, e_pad - e), (0, 0)))                       # (E_pad, N)
    g_m = jnp.pad(jax.nn.one_hot(nu_pad + edge_label_index[1], n,
                                 dtype=jnp.float32),
                  ((0, e_pad - e), (0, 0)))                       # (E_pad, N)
    return jnp.concatenate([a_blk, g_u, g_m], axis=0).astype(jnp.bfloat16)


def init_params(key, hidden, num_users, num_movies, movie_feat_dim=20):
    ks = jax.random.split(key, 16)
    s = 0.1

    def w(k, shape):
        return s * jax.random.normal(k, shape, jnp.float32)

    def sage(k3):
        k_a, k_b, k_c = jax.random.split(k3, 3)
        return {"w_l": w(k_a, (hidden, hidden)),   # lin_l (with bias)
                "b_l": w(k_c, (hidden,)),
                "w_r": w(k_b, (hidden, hidden))}   # lin_r (no bias)

    return {
        "movie_lin_w": w(ks[0], (hidden, movie_feat_dim)),
        "movie_lin_b": w(ks[7], (hidden,)),
        "user_emb": w(ks[1], (num_users, hidden)),
        "movie_emb": w(ks[2], (num_movies, hidden)),
        # to_hetero(GNN): one SAGEConv copy per layer per edge type
        "conv1_u2m": sage(ks[3]),   # ('user','rates','movie')
        "conv1_m2u": sage(ks[4]),   # ('movie','rev_rates','user')
        "conv2_u2m": sage(ks[5]),
        "conv2_m2u": sage(ks[6]),
    }


def prepare_params(params, nu_pad, nm_pad, f_pad):
    """Kernel-ready packed params: transposed, stacked, padded, bf16 cast."""
    bf16 = jnp.bfloat16
    h = params["movie_lin_w"].shape[0]
    feat = params["movie_lin_w"].shape[1]

    # movie Linear: W^T padded on the (zeroed) extra feature rows
    w_in = jnp.pad(params["movie_lin_w"].T,
                   ((0, f_pad - feat), (0, 0))).astype(bf16)      # (Fp, H)

    # per-layer stacked conv weight, matching cat = [agg_u, x_u, agg_m, x_m]
    def stack_layer(p_m2u, p_u2m):
        return jnp.concatenate([p_m2u["w_l"].T, p_m2u["w_r"].T,
                                p_u2m["w_l"].T, p_u2m["w_r"].T], axis=0)

    w_conv = jnp.stack([
        stack_layer(params["conv1_m2u"], params["conv1_u2m"]),
        stack_layer(params["conv2_m2u"], params["conv2_u2m"]),
    ]).astype(bf16)                                               # (2, 4H, H)

    def row_bias(b_user, b_movie):
        return jnp.concatenate([jnp.broadcast_to(b_user, (nu_pad, h)),
                                jnp.broadcast_to(b_movie, (nm_pad, h))], 0)

    bias = jnp.stack([
        row_bias(jnp.zeros((h,), jnp.float32), params["movie_lin_b"]),
        row_bias(params["conv1_m2u"]["b_l"], params["conv1_u2m"]["b_l"]),
        row_bias(params["conv2_m2u"]["b_l"], params["conv2_u2m"]["b_l"]),
    ]).astype(jnp.float32)                                        # (3, N, H)

    return {"w_in": w_in, "w_conv": w_conv, "bias": bias,
            "user_emb": params["user_emb"], "movie_emb": params["movie_emb"]}


def _pack_node_inputs(kparams, user_node_id, movie_x, movie_node_id,
                      nu_pad, nm_pad):
    """Stacked/padded node inputs: (N,H) embeddings + (N,Fp) raw movie feats."""
    f_pad = kparams["w_in"].shape[0]
    xu = kparams["user_emb"][user_node_id]
    xm = kparams["movie_emb"][movie_node_id]
    xu = jnp.pad(xu, ((0, nu_pad - xu.shape[0]), (0, 0)))
    xm = jnp.pad(xm, ((0, nm_pad - xm.shape[0]), (0, 0)))
    x0 = jnp.concatenate([xu, xm], axis=0).astype(jnp.float32)    # (N, H)
    feat = jnp.pad(movie_x, ((0, nm_pad - movie_x.shape[0]),
                             (0, f_pad - movie_x.shape[1])))
    xfeat = jnp.concatenate(
        [jnp.zeros((nu_pad, f_pad), jnp.float32), feat],
        axis=0).astype(jnp.bfloat16)                              # (N, Fp)
    return x0, xfeat


# ----------------------------------------------------------------------------
# Model forward (Pallas) and references
# ----------------------------------------------------------------------------
@functools.partial(jax.jit, static_argnames=("nu_pad", "nm_pad"))
def model_forward(kparams, user_node_id, movie_x, movie_node_id, graph, *,
                  nu_pad, nm_pad):
    x0, xfeat = _pack_node_inputs(kparams, user_node_id, movie_x,
                                  movie_node_id, nu_pad, nm_pad)
    return fused_forward_pallas(x0, xfeat, kparams["w_in"], kparams["w_conv"],
                                kparams["bias"], graph, nu_pad)   # (E_pad,)


def fused_forward_ref(x0, xfeat, w_in, w_conv, bias, graph, nu_pad):
    """Pure-JAX reference mirroring the kernel math (incl. bf16 casts)."""
    f32, bf16 = jnp.float32, jnp.bfloat16
    n = x0.shape[0]
    e_pad = (graph.shape[0] - n) // 2
    x = x0 + jnp.dot(xfeat, w_in, preferred_element_type=f32) + bias[0]
    row = jnp.arange(n)[:, None]
    mask_u = (row < nu_pad).astype(f32)
    mask_m = 1.0 - mask_u
    a, g = graph[:n], graph[n:]

    def layer(x, idx, relu):
        agg = jnp.dot(a, x.astype(bf16), preferred_element_type=f32)
        cat = jnp.concatenate(
            [agg * mask_u, x * mask_u, agg * mask_m, x * mask_m],
            axis=-1).astype(bf16)
        out = jnp.dot(cat, w_conv[idx], preferred_element_type=f32) + bias[idx + 1]
        return jnp.maximum(out, 0.0) if relu else out

    x1 = layer(x, 0, True)
    x2 = layer(x1, 1, False)
    ef = jnp.dot(g, x2.astype(bf16), preferred_element_type=f32)
    return jnp.sum(ef[:e_pad] * ef[e_pad:], axis=-1)              # (E_pad,)


def model_forward_f32_ref(params, user_node_id, movie_x, movie_node_id,
                          edge_index_u2m, edge_label_index,
                          num_users, num_movies):
    """Full-precision reference matching the original PyTorch formulation."""
    def sage(a, xs, xd, p, relu):
        out = (a @ xs) @ p["w_l"].T + xd @ p["w_r"].T + p["b_l"]
        return jnp.maximum(out, 0.0) if relu else out

    x_user = params["user_emb"][user_node_id]
    x_movie = (movie_x @ params["movie_lin_w"].T + params["movie_lin_b"]
               + params["movie_emb"][movie_node_id])
    a_u2m = build_mean_adj(edge_index_u2m[1], edge_index_u2m[0],
                           num_movies, num_users)
    a_m2u = build_mean_adj(edge_index_u2m[0], edge_index_u2m[1],
                           num_users, num_movies)
    xu1 = sage(a_m2u, x_movie, x_user, params["conv1_m2u"], True)
    xm1 = sage(a_u2m, x_user, x_movie, params["conv1_u2m"], True)
    xu2 = sage(a_m2u, xm1, xu1, params["conv2_m2u"], False)
    xm2 = sage(a_u2m, xu1, xm1, params["conv2_u2m"], False)
    return jnp.sum(xu2[edge_label_index[0]] * xm2[edge_label_index[1]], axis=-1)


# ----------------------------------------------------------------------------
if __name__ == "__main__":
    hidden = 32
    num_users = 16
    num_movies = 24
    movie_feat_dim = 20
    num_edges = 48
    num_label_edges = 16

    nu_pad = _round_up(num_users, 16)                 # 16
    nm_pad = _round_up(num_movies, 16)                # 32
    f_pad = _round_up(movie_feat_dim, 16)             # 32
    e_pad = _round_up(max(num_label_edges, _LANE), _LANE)   # 128

    key = jax.random.PRNGKey(0)
    k_param, k_x, k_src, k_dst, k_lu, k_lm = jax.random.split(key, 6)

    params = init_params(k_param, hidden, num_users, num_movies, movie_feat_dim)
    kparams = prepare_params(params, nu_pad, nm_pad, f_pad)

    user_node_id = jnp.arange(num_users, dtype=jnp.int32)
    movie_node_id = jnp.arange(num_movies, dtype=jnp.int32)
    movie_x = jax.random.normal(k_x, (num_movies, movie_feat_dim), jnp.float32)

    edge_index_u2m = jnp.stack([
        jax.random.randint(k_src, (num_edges,), 0, num_users, jnp.int32),
        jax.random.randint(k_dst, (num_edges,), 0, num_movies, jnp.int32),
    ])
    edge_label_index = jnp.stack([
        jax.random.randint(k_lu, (num_label_edges,), 0, num_users, jnp.int32),
        jax.random.randint(k_lm, (num_label_edges,), 0, num_movies, jnp.int32),
    ])

    # Static graph tensors, hoisted out of the forward (one packed buffer).
    graph = precompute_graph(edge_index_u2m, edge_label_index,
                             num_users, num_movies, nu_pad, nm_pad, e_pad)

    pred_pad = jax.block_until_ready(
        model_forward(kparams, user_node_id, movie_x, movie_node_id, graph,
                      nu_pad=nu_pad, nm_pad=nm_pad))
    pred = pred_pad[:num_label_edges]

    # Tight check against a reference with identical (bf16) arithmetic.
    x0, xfeat = _pack_node_inputs(kparams, user_node_id, movie_x,
                                  movie_node_id, nu_pad, nm_pad)
    ref = jax.block_until_ready(
        fused_forward_ref(x0, xfeat, kparams["w_in"], kparams["w_conv"],
                          kparams["bias"], graph, nu_pad))[:num_label_edges]
    # Loose check against the full-f32 original-formulation reference.
    ref_f32 = jax.block_until_ready(
        model_forward_f32_ref(params, user_node_id, movie_x, movie_node_id,
                              edge_index_u2m, edge_label_index,
                              num_users, num_movies))

    assert pred.shape == (num_label_edges,)
    assert jnp.allclose(pred, ref, rtol=2e-2, atol=2e-3), (pred, ref)
    assert jnp.allclose(pred, ref_f32, rtol=1e-1, atol=5e-2), (pred, ref_f32)
    print("KERNEL_OK")
</pallas_src>

<mosaic_0001>
module attributes {stable_mosaic.version = 11 : i64} {
  func.func @kernel(%arg0: memref<48x32xf32, #tpu.memory_space<vmem>>, %arg1: memref<48x32xbf16, #tpu.memory_space<vmem>>, %arg2: memref<32x32xbf16, #tpu.memory_space<vmem>>, %arg3: memref<2x128x32xbf16, #tpu.memory_space<vmem>>, %arg4: memref<3x48x32xf32, #tpu.memory_space<vmem>>, %arg5: memref<304x48xbf16, #tpu.memory_space<vmem>>, %arg6: memref<1x128xf32, #tpu.memory_space<vmem>>) attributes {dimension_semantics = [], scalar_prefetch = 0 : i64, scratch_operands = 0 : i64, tpu.core_type = #tpu.core_type<tc>} {
    %c0 = arith.constant 0 : index
    %c0_0 = arith.constant 0 : index
    %0 = vector.load %arg0[%c0, %c0_0] : memref<48x32xf32, #tpu.memory_space<vmem>>, vector<48x32xf32>
    %c0_1 = arith.constant 0 : index
    %c0_2 = arith.constant 0 : index
    %1 = vector.load %arg1[%c0_1, %c0_2] : memref<48x32xbf16, #tpu.memory_space<vmem>>, vector<48x32xbf16>
    %c0_3 = arith.constant 0 : index
    %c0_4 = arith.constant 0 : index
    %2 = vector.load %arg2[%c0_3, %c0_4] : memref<32x32xbf16, #tpu.memory_space<vmem>>, vector<32x32xbf16>
    %cst = arith.constant dense<0.000000e+00> : vector<48x32xf32>
    %3 = tpu.matmul %1, %2, %cst {dimension_numbers = #tpu.dot_dimension_numbers<[1], [0], [0], [1], [0, 0, 1, 1], [], []>} : vector<48x32xbf16>, vector<32x32xbf16>, vector<48x32xf32> -> vector<48x32xf32>
    %4 = arith.addf %0, %3 : vector<48x32xf32>
    %c0_5 = arith.constant 0 : index
    %c0_6 = arith.constant 0 : index
    %c0_7 = arith.constant 0 : index
    %5 = vector.load %arg4[%c0_5, %c0_6, %c0_7] : memref<3x48x32xf32, #tpu.memory_space<vmem>>, vector<1x48x32xf32>
    %6 = vector.shape_cast %5 : vector<1x48x32xf32> to vector<48x32xf32>
    %7 = arith.addf %4, %6 : vector<48x32xf32>
    %8 = tpu.iota {dimensions = array<i32: 0>} : vector<48x1xi32>
    %c16_i32 = arith.constant 16 : i32
    %9 = vector.broadcast %c16_i32 : i32 to vector<48x1xi32>
    %10 = arith.cmpi slt, %8, %9 : vector<48x1xi32>
    %11 = arith.extui %10 : vector<48x1xi1> to vector<48x1xi32>
    %12 = arith.sitofp %11 : vector<48x1xi32> to vector<48x1xf32>
    %cst_8 = arith.constant 1.000000e+00 : f32
    %13 = vector.broadcast %cst_8 : f32 to vector<48x1xf32>
    %14 = arith.subf %13, %12 : vector<48x1xf32>
    %c0_9 = arith.constant 0 : index
    %c0_10 = arith.constant 0 : index
    %15 = vector.load %arg5[%c0_9, %c0_10] : memref<304x48xbf16, #tpu.memory_space<vmem>>, vector<48x48xbf16>
    %c48 = arith.constant 48 : index
    %c0_11 = arith.constant 0 : index
    %16 = vector.load %arg5[%c48, %c0_11] : memref<304x48xbf16, #tpu.memory_space<vmem>>, vector<256x48xbf16>
    %17 = arith.truncf %7 : vector<48x32xf32> to vector<48x32xbf16>
    %cst_12 = arith.constant dense<0.000000e+00> : vector<48x32xf32>
    %18 = tpu.matmul %15, %17, %cst_12 {dimension_numbers = #tpu.dot_dimension_numbers<[1], [0], [0], [1], [0, 0, 1, 1], [], []>} : vector<48x48xbf16>, vector<48x32xbf16>, vector<48x32xf32> -> vector<48x32xf32>
    %19 = vector.broadcast %12 : vector<48x1xf32> to vector<48x32xf32>
    %20 = arith.mulf %18, %19 : vector<48x32xf32>
    %21 = vector.broadcast %12 : vector<48x1xf32> to vector<48x32xf32>
    %22 = arith.mulf %7, %21 : vector<48x32xf32>
    %23 = vector.broadcast %14 : vector<48x1xf32> to vector<48x32xf32>
    %24 = arith.mulf %18, %23 : vector<48x32xf32>
    %25 = vector.broadcast %14 : vector<48x1xf32> to vector<48x32xf32>
    %26 = arith.mulf %7, %25 : vector<48x32xf32>
    %27 = tpu.concatenate %20, %22, %24, %26 in 1 : vector<48x32xf32>, vector<48x32xf32>, vector<48x32xf32>, vector<48x32xf32> -> vector<48x128xf32>
    %28 = arith.truncf %27 : vector<48x128xf32> to vector<48x128xbf16>
    %c0_13 = arith.constant 0 : index
    %c0_14 = arith.constant 0 : index
    %c0_15 = arith.constant 0 : index
    %29 = vector.load %arg3[%c0_13, %c0_14, %c0_15] : memref<2x128x32xbf16, #tpu.memory_space<vmem>>, vector<1x128x32xbf16>
    %30 = vector.shape_cast %29 : vector<1x128x32xbf16> to vector<128x32xbf16>
    %cst_16 = arith.constant dense<0.000000e+00> : vector<48x32xf32>
    %31 = tpu.matmul %28, %30, %cst_16 {dimension_numbers = #tpu.dot_dimension_numbers<[1], [0], [0], [1], [0, 0, 1, 1], [], []>} : vector<48x128xbf16>, vector<128x32xbf16>, vector<48x32xf32> -> vector<48x32xf32>
    %c1 = arith.constant 1 : index
    %c0_17 = arith.constant 0 : index
    %c0_18 = arith.constant 0 : index
    %32 = vector.load %arg4[%c1, %c0_17, %c0_18] : memref<3x48x32xf32, #tpu.memory_space<vmem>>, vector<1x48x32xf32>
    %33 = vector.shape_cast %32 : vector<1x48x32xf32> to vector<48x32xf32>
    %34 = arith.addf %31, %33 : vector<48x32xf32>
    %cst_19 = arith.constant 0.000000e+00 : f32
    %35 = vector.broadcast %cst_19 : f32 to vector<48x32xf32>
    %36 = arith.maximumf %34, %35 : vector<48x32xf32>
    %37 = arith.truncf %36 : vector<48x32xf32> to vector<48x32xbf16>
    %cst_20 = arith.constant dense<0.000000e+00> : vector<48x32xf32>
    %38 = tpu.matmul %15, %37, %cst_20 {dimension_numbers = #tpu.dot_dimension_numbers<[1], [0], [0], [1], [0, 0, 1, 1], [], []>} : vector<48x48xbf16>, vector<48x32xbf16>, vector<48x32xf32> -> vector<48x32xf32>
    %39 = vector.broadcast %12 : vector<48x1xf32> to vector<48x32xf32>
    %40 = arith.mulf %38, %39 : vector<48x32xf32>
    %41 = vector.broadcast %12 : vector<48x1xf32> to vector<48x32xf32>
    %42 = arith.mulf %36, %41 : vector<48x32xf32>
    %43 = vector.broadcast %14 : vector<48x1xf32> to vector<48x32xf32>
    %44 = arith.mulf %38, %43 : vector<48x32xf32>
    %45 = vector.broadcast %14 : vector<48x1xf32> to vector<48x32xf32>
    %46 = arith.mulf %36, %45 : vector<48x32xf32>
    %47 = tpu.concatenate %40, %42, %44, %46 in 1 : vector<48x32xf32>, vector<48x32xf32>, vector<48x32xf32>, vector<48x32xf32> -> vector<48x128xf32>
    %48 = arith.truncf %47 : vector<48x128xf32> to vector<48x128xbf16>
    %c1_21 = arith.constant 1 : index
    %c0_22 = arith.constant 0 : index
    %c0_23 = arith.constant 0 : index
    %49 = vector.load %arg3[%c1_21, %c0_22, %c0_23] : memref<2x128x32xbf16, #tpu.memory_space<vmem>>, vector<1x128x32xbf16>
    %50 = vector.shape_cast %49 : vector<1x128x32xbf16> to vector<128x32xbf16>
    %cst_24 = arith.constant dense<0.000000e+00> : vector<48x32xf32>
    %51 = tpu.matmul %48, %50, %cst_24 {dimension_numbers = #tpu.dot_dimension_numbers<[1], [0], [0], [1], [0, 0, 1, 1], [], []>} : vector<48x128xbf16>, vector<128x32xbf16>, vector<48x32xf32> -> vector<48x32xf32>
    %c2 = arith.constant 2 : index
    %c0_25 = arith.constant 0 : index
    %c0_26 = arith.constant 0 : index
    %52 = vector.load %arg4[%c2, %c0_25, %c0_26] : memref<3x48x32xf32, #tpu.memory_space<vmem>>, vector<1x48x32xf32>
    %53 = vector.shape_cast %52 : vector<1x48x32xf32> to vector<48x32xf32>
    %54 = arith.addf %51, %53 : vector<48x32xf32>
    %55 = arith.truncf %54 : vector<48x32xf32> to vector<48x32xbf16>
    %cst_27 = arith.constant dense<0.000000e+00> : vector<256x32xf32>
    %56 = tpu.matmul %16, %55, %cst_27 {dimension_numbers = #tpu.dot_dimension_numbers<[1], [0], [0], [1], [0, 0, 1, 1], [], []>} : vector<256x48xbf16>, vector<48x32xbf16>, vector<256x32xf32> -> vector<256x32xf32>
    %57 = vector.extract_strided_slice %56 {offsets = [0, 0], sizes = [128, 32], strides = [1, 1]} : vector<256x32xf32> to vector<128x32xf32>
    %58 = vector.extract_strided_slice %56 {offsets = [128, 0], sizes = [128, 32], strides = [1, 1]} : vector<256x32xf32> to vector<128x32xf32>
    %59 = arith.mulf %57, %58 : vector<128x32xf32>
    %cst_28 = arith.constant 1.000000e+00 : f32
    %60 = vector.broadcast %cst_28 : f32 to vector<1x32xf32>
    %cst_29 = arith.constant dense<0.000000e+00> : vector<1x128xf32>
    %61 = tpu.matmul %60, %59, %cst_29 {dimension_numbers = #tpu.dot_dimension_numbers<[1], [1], [0], [0], [0, 0, 1, 0], [], []>} : vector<1x32xf32>, vector<128x32xf32>, vector<1x128xf32> -> vector<1x128xf32>
    %c0_30 = arith.constant 0 : index
    %c0_31 = arith.constant 0 : index
    %62 = vector.load %arg6[%c0_30, %c0_31] : memref<1x128xf32, #tpu.memory_space<vmem>>, vector<1x128xf32>
    tpu.vector_store %arg6[%c0_30, %c0_31], %61 {strides = array<i32>} : memref<1x128xf32, #tpu.memory_space<vmem>>, vector<1x128xf32>,
    return
  }
}

</mosaic_0001>

<llo_original>
// kernel: model_forward.1
$region0: #{model_forward.1}
  #allocation0 [shape = 'u32[]', space=smem, size = 0x4, offset = 0x4, fixed_abs, tag = 'smem constant byte address 0x4 - core index']
  #allocation1 [shape = 'u32[144,128]{1,0:T(1,128)}', space=vmem, size = 0x12000, scoped, tag = 'internal scratch']
  %s0 = inlined_call_operand.vmem [shape: f32[48,32], index: 0, kind: input, shape index: {}]
  %s1 = inlined_call_operand.vmem [shape: bf16[48,32], index: 1, kind: input, shape index: {}]
  %s2 = inlined_call_operand.vmem [shape: bf16[32,32], index: 2, kind: input, shape index: {}]
  %s3 = inlined_call_operand.vmem [shape: bf16[2,128,32], index: 3, kind: input, shape index: {}]
  %s4 = inlined_call_operand.vmem [shape: f32[3,48,32], index: 4, kind: input, shape index: {}]
  %s5 = inlined_call_operand.vmem [shape: bf16[304,48], index: 5, kind: input, shape index: {}]
  %s6 = inlined_call_operand.hbm [shape: f32[1,128], index: 6, kind: output, shape index: {}]
  %s7 = sld [smem:[#allocation0]]
  $region34: #{model_forward.1} parent=0
    _
  %s9 = ssub.s32 1, %s7
  %s10 = scalar_select 0, %s9, %s7
  $region1: #{model_forward.1} parent=0
    #allocation2 [shape = 'u8[512]{0}', space=vmem, size = 0x400, scoped, tag = 'output window, operand 0, single buffered']
    #allocation3 [shape = 's32[1]{0}', space=sflag, size = 0x4, scoped, tag = 'scoped memory for model_forward.1']
    %11 = vsyncpa [#allocation3], 0
    // Predicated region
    $region2: #{model_forward.1} parent=1 // pred_check
      _
    $region3: #{model_forward.1} parent=1 // pred_check_branch
      %13 = sbr.rel (0) target = $region5
    $region4: #{model_forward.1} parent=1 // pred_region
      _
    $region5: #{model_forward.1} parent=1 // pred_fallthru
      _
    // Predicated region
    $region6: #{model_forward.1} parent=1 // pred_check
      _
    $region7: #{model_forward.1} parent=1 // pred_check_branch
      %15 = sbr.rel (0) target = $region9
    $region8: #{model_forward.1} parent=1 // pred_region
      _
    $region9: #{model_forward.1} parent=1 // pred_fallthru
      _
    // Predicated region
    $region10: #{model_forward.1} parent=1 // pred_check
      _
    $region11: #{model_forward.1} parent=1 // pred_check_branch
      %17 = sbr.rel (0) target = $region13
    $region12: #{model_forward.1} parent=1 // pred_region
      _
    $region13: #{model_forward.1} parent=1 // pred_fallthru
      _
    // Predicated region
    $region14: #{model_forward.1} parent=1 // pred_check
      _
    $region15: #{model_forward.1} parent=1 // pred_check_branch
      %19 = sbr.rel (0) target = $region17
    $region16: #{model_forward.1} parent=1 // pred_region
      _
    $region17: #{model_forward.1} parent=1 // pred_fallthru
      _
    // Predicated region
    $region18: #{model_forward.1} parent=1 // pred_check
      _
    $region19: #{model_forward.1} parent=1 // pred_check_branch
      %21 = sbr.rel (0) target = $region21
    $region20: #{model_forward.1} parent=1 // pred_region
      _
    $region21: #{model_forward.1} parent=1 // pred_fallthru
      _
    // Predicated region
    $region22: #{model_forward.1} parent=1 // pred_check
      _
    $region23: #{model_forward.1} parent=1 // pred_check_branch
      %23 = sbr.rel (0) target = $region25
    $region24: #{model_forward.1} parent=1 // pred_region
      _
    $region25: #{model_forward.1} parent=1 // pred_fallthru
      _
    %v25 = vld [vmem:[%s0] sm:$0xff]
    %v26 = vld [vmem:[%s0 + $0x8] sm:$0xff]
    %v27 = vld [vmem:[%s0 + $0x10] sm:$0xff]
    %v28 = vld [vmem:[%s0 + $0x18] sm:$0xff]
    %v29 = vld [vmem:[%s0 + $0x20] sm:$0xff]
    %v30 = vld [vmem:[%s0 + $0x28] sm:$0xff]
    %v31 = vld [vmem:[%s1] sm:$0xf]
    %v32 = vld [vmem:[%s1 + $0x4] sm:$0xf]
    %v33 = vld [vmem:[%s1 + $0x8] sm:$0xf]
    %v34 = vld [vmem:[%s1 + $0xc] sm:$0xf]
    %v35 = vld [vmem:[%s1 + $0x10] sm:$0xf]
    %v36 = vld [vmem:[%s1 + $0x14] sm:$0xf]
    %v37 = vld [vmem:[%s2] sm:$0xf]
    %v38 = vld [vmem:[%s2 + $0x4] sm:$0xf]
    %v39 = vld [vmem:[%s2 + $0x8] sm:$0xf]
    %v40 = vld [vmem:[%s2 + $0xc] sm:$0xf]
    %v47 = vunpack.c.l.b16 %v31
    %v48 = vunpack.c.l.b16 %v32
    %v49 = vunpack.c.l.b16 %v33
    %v50 = vunpack.c.l.b16 %v34
    %v51 = vunpack.c.l.b16 %v35
    %v52 = vunpack.c.l.b16 %v36
    %v53 = vpack.c.b16 %v48, %v47
    %v54 = vpack.c.b16 %v50, %v49
    %v55 = vpack.c.b16 %v52, %v51
    %v60 = vunpack.c.l.b16 %v37
    %v61 = vunpack.c.l.b16 %v38
    %v62 = vunpack.c.l.b16 %v39
    %v63 = vunpack.c.l.b16 %v40
    %v64 = vpack.c.b16 %v61, %v60
    %v65 = vpack.c.b16 %v63, %v62
    %vm68 = vcmask 261120
    %v70 = vsel %vm68, %v53, 0
    %v73 = vsel %vm68, %v54, 0
    %v76 = vsel %vm68, %v55, 0
    %78 = vmatprep.subr.bf16.mxu0 0
    %79 = vmatpush1.bf16.msra.mxu0 %v64
    %80 = vmatprep.subr.bf16.mxu0 0
    %81 = vmatpush1.bf16.msra.mxu0 %v65
    %82 = vmatprep.subr.bf16.mxu0 0
    %83 = vmatpush1.bf16.msra.mxu0 0
    %84 = vmatprep.subr.bf16.mxu0 0
    %85 = vmatpush1.bf16.msra.mxu0 0
    %86 = vmatprep.subr.bf16.mxu0 0
    %87 = vmatpush1.bf16.msra.mxu0 0
    %88 = vmatprep.subr.bf16.mxu0 0
    %89 = vmatpush1.bf16.msra.mxu0 0
    %90 = vmatprep.subr.bf16.mxu0 0
    %91 = vmatpush1.bf16.msra.mxu0 0
    %92 = vmatprep.subr.bf16.mxu0 0
    %93 = vmatpush1.bf16.msra.mxu0 0
    %94 = vmatprep.subr.bf16.mxu0 0
    %95 = vmatpush1.bf16.msra.mxu0 0
    %96 = vmatprep.subr.bf16.mxu0 0
    %97 = vmatpush1.bf16.msra.mxu0 0
    %98 = vmatprep.subr.bf16.mxu0 0
    %99 = vmatpush1.bf16.msra.mxu0 0
    %100 = vmatprep.subr.bf16.mxu0 0
    %101 = vmatpush1.bf16.msra.mxu0 0
    %102 = vmatprep.subr.bf16.mxu0 0
    %103 = vmatpush1.bf16.msra.mxu0 0
    %104 = vmatprep.subr.bf16.mxu0 0
    %105 = vmatpush1.bf16.msra.mxu0 0
    %106 = vmatprep.subr.bf16.mxu0 0
    %107 = vmatpush1.bf16.msra.mxu0 0
    %108 = vmatprep.subr.bf16.mxu0 0
    %109 = vmatpush1.bf16.msra.mxu0 0
    %110 = vmatprep.mubr.bf16.mxu0 0
    %111 = vmatmul.mubr.bf16.gmra.mrb[0].mxu0 %v70
    %v112 = vpop.f32.mrb[0].mxu0
    %v113 = vadd.f32 0.0, %v112
    %v114 = vpop.f32.mrb[0].mxu0
    %v115 = vpop.f32.mrb[0].mxu0
    %v116 = vadd.f32 0.0, %v115
    %v117 = vpop.f32.mrb[0].mxu0
    %118 = vmatprep.mubr.bf16.mxu0 0
    %119 = vmatmul.mubr.bf16.gmra.mrb[0].mxu0 %v73
    %v120 = vpop.f32.mrb[0].mxu0
    %v121 = vadd.f32 0.0, %v120
    %v122 = vpop.f32.mrb[0].mxu0
    %v123 = vpop.f32.mrb[0].mxu0
    %v124 = vadd.f32 0.0, %v123
    %v125 = vpop.f32.mrb[0].mxu0
    %126 = vmatprep.mubr.bf16.mxu0 0
    %127 = vmatmul.mubr.bf16.gmra.mrb[0].mxu0 %v76
    %v128 = vpop.f32.mrb[0].mxu0
    %v129 = vadd.f32 0.0, %v128
    %v130 = vpop.f32.mrb[0].mxu0
    %v131 = vpop.f32.mrb[0].mxu0
    %v132 = vadd.f32 0.0, %v131
    %v133 = vpop.f32.mrb[0].mxu0
    %134 = vdwg.mxu0
    %v135 = vadd.f32 %v25, %v113
    %v136 = vadd.f32 %v26, %v116
    %v137 = vadd.f32 %v27, %v121
    %v138 = vadd.f32 %v28, %v124
    %v139 = vadd.f32 %v29, %v129
    %v140 = vadd.f32 %v30, %v132
    %v141 = vld [vmem:[%s4] sm:$0xff]
    %v142 = vld [vmem:[%s4 + $0x8] sm:$0xff]
    %v143 = vld [vmem:[%s4 + $0x10] sm:$0xff]
    %v144 = vld [vmem:[%s4 + $0x18] sm:$0xff]
    %v145 = vld [vmem:[%s4 + $0x20] sm:$0xff]
    %v146 = vld [vmem:[%s4 + $0x28] sm:$0xff]
    %v147 = vadd.f32 %v135, %v141
    %v148 = vadd.f32 %v136, %v142
    %v149 = vadd.f32 %v137, %v143
    %v150 = vadd.f32 %v138, %v144
    %v151 = vadd.f32 %v139, %v145
    %v152 = vadd.f32 %v140, %v146
    %v153 = vlaneseq
    %v154 = vshrl.u32 %v153, 7
    %v155 = vadd.s32 %v154, 8
    %v156 = vadd.s32 %v154, 16
    %v157 = vadd.s32 %v154, 24
    %v158 = vadd.s32 %v154, 32
    %v159 = vadd.s32 %v154, 40
    %vm160 = vcmp.lt.s32.totalorder %v154, 16
    %vm161 = vcmp.lt.s32.totalorder %v155, 16
    %vm162 = vcmp.lt.s32.totalorder %v156, 16
    %vm163 = vcmp.lt.s32.totalorder %v157, 16
    %vm164 = vcmp.lt.s32.totalorder %v158, 16
    %vm165 = vcmp.lt.s32.totalorder %v159, 16
    %v166 = vsel %vm160, 1, 0
    %v167 = vsel %vm161, 1, 0
    %v168 = vsel %vm162, 1, 0
    %v169 = vsel %vm163, 1, 0
    %v170 = vsel %vm164, 1, 0
    %v171 = vsel %vm165, 1, 0
    %v172 = vcvt.s32.f32 %v166
    %v173 = vcvt.s32.f32 %v167
    %v174 = vcvt.s32.f32 %v168
    %v175 = vcvt.s32.f32 %v169
    %v176 = vcvt.s32.f32 %v170
    %v177 = vcvt.s32.f32 %v171
    %v178 = vsub.f32 1.0, %v172
    %v179 = vsub.f32 1.0, %v173
    %v180 = vsub.f32 1.0, %v174
    %v181 = vsub.f32 1.0, %v175
    %v182 = vsub.f32 1.0, %v176
    %v183 = vsub.f32 1.0, %v177
    %v184 = vld [vmem:[%s5] sm:$0xf]
    %v185 = vld [vmem:[%s5 + $0x4] sm:$0xf]
    %v186 = vld [vmem:[%s5 + $0x8] sm:$0xf]
    %v187 = vld [vmem:[%s5 + $0xc] sm:$0xf]
    %v188 = vld [vmem:[%s5 + $0x10] sm:$0xf]
    %v189 = vld [vmem:[%s5 + $0x14] sm:$0xf]
    %v190 = vld [vmem:[%s5 + $0x18] sm:$0xf]
    %v191 = vld [vmem:[%s5 + $0x1c] sm:$0xf]
    %v192 = vld [vmem:[%s5 + $0x20] sm:$0xf]
    %v193 = vld [vmem:[%s5 + $0x24] sm:$0xf]
    %v194 = vld [vmem:[%s5 + $0x28] sm:$0xf]
    %v195 = vld [vmem:[%s5 + $0x2c] sm:$0xf]
    %v196 = vld [vmem:[%s5 + $0x30] sm:$0xf]
    %v197 = vld [vmem:[%s5 + $0x34] sm:$0xf]
    %v198 = vld [vmem:[%s5 + $0x38] sm:$0xf]
    %v199 = vld [vmem:[%s5 + $0x3c] sm:$0xf]
    %v200 = vld [vmem:[%s5 + $0x40] sm:$0xf]
    %v201 = vld [vmem:[%s5 + $0x44] sm:$0xf]
    %v202 = vld [vmem:[%s5 + $0x48] sm:$0xf]
    %v203 = vld [vmem:[%s5 + $0x4c] sm:$0xf]
    %v204 = vld [vmem:[%s5 + $0x50] sm:$0xf]
    %v205 = vld [vmem:[%s5 + $0x54] sm:$0xf]
    %v206 = vld [vmem:[%s5 + $0x58] sm:$0xf]
    %v207 = vld [vmem:[%s5 + $0x5c] sm:$0xf]
    %v208 = vld [vmem:[%s5 + $0x60] sm:$0xf]
    %v209 = vld [vmem:[%s5 + $0x64] sm:$0xf]
    %v210 = vld [vmem:[%s5 + $0x68] sm:$0xf]
    %v211 = vld [vmem:[%s5 + $0x6c] sm:$0xf]
    %v212 = vld [vmem:[%s5 + $0x70] sm:$0xf]
    %v213 = vld [vmem:[%s5 + $0x74] sm:$0xf]
    %v214 = vld [vmem:[%s5 + $0x78] sm:$0xf]
    %v215 = vld [vmem:[%s5 + $0x7c] sm:$0xf]
    %v216 = vld [vmem:[%s5 + $0x80] sm:$0xf]
    %v217 = vld [vmem:[%s5 + $0x84] sm:$0xf]
    %v218 = vld [vmem:[%s5 + $0x88] sm:$0xf]
    %v219 = vld [vmem:[%s5 + $0x8c] sm:$0xf]
    %v220 = vld [vmem:[%s5 + $0x90] sm:$0xf]
    %v221 = vld [vmem:[%s5 + $0x94] sm:$0xf]
    %v222 = vpack.c.bf16 %v148, %v147
    %v223 = vpack.c.bf16 %v150, %v149
    %v224 = vpack.c.bf16 %v152, %v151
    %v231 = vunpack.c.l.b16 %v184
    %v232 = vunpack.c.l.b16 %v185
    %v233 = vunpack.c.l.b16 %v186
    %v234 = vunpack.c.l.b16 %v187
    %v235 = vunpack.c.l.b16 %v188
    %v236 = vunpack.c.l.b16 %v189
    %v237 = vpack.c.b16 %v232, %v231
    %v238 = vpack.c.b16 %v234, %v233
    %v239 = vpack.c.b16 %v236, %v235
    %vm240 = vcmask 392192
    %v242 = vsel %vm240, %v237, 0
    %v245 = vsel %vm240, %v238, 0
    %v248 = vsel %vm240, %v239, 0
    %250 = vmatprep.subr.bf16.mxu0 0
    %251 = vmatpush1.bf16.msra.mxu0 %v222
    %252 = vmatprep.subr.bf16.mxu0 0
    %253 = vmatpush1.bf16.msra.mxu0 %v223
    %254 = vmatprep.subr.bf16.mxu0 0
    %255 = vmatpush1.bf16.msra.mxu0 %v224
    %256 = vmatprep.subr.bf16.mxu0 0
    %257 = vmatpush1.bf16.msra.mxu0 0
    %258 = vmatprep.subr.bf16.mxu0 0
    %259 = vmatpush1.bf16.msra.mxu0 0
    %260 = vmatprep.subr.bf16.mxu0 0
    %261 = vmatpush1.bf16.msra.mxu0 0
    %262 = vmatprep.subr.bf16.mxu0 0
    %263 = vmatpush1.bf16.msra.mxu0 0
    %264 = vmatprep.subr.bf16.mxu0 0
    %265 = vmatpush1.bf16.msra.mxu0 0
    %266 = vmatprep.subr.bf16.mxu0 0
    %267 = vmatpush1.bf16.msra.mxu0 0
    %268 = vmatprep.subr.bf16.mxu0 0
    %269 = vmatpush1.bf16.msra.mxu0 0
    %270 = vmatprep.subr.bf16.mxu0 0
    %271 = vmatpush1.bf16.msra.mxu0 0
    %272 = vmatprep.subr.bf16.mxu0 0
    %273 = vmatpush1.bf16.msra.mxu0 0
    %274 = vmatprep.subr.bf16.mxu0 0
    %275 = vmatpush1.bf16.msra.mxu0 0
    %276 = vmatprep.subr.bf16.mxu0 0
    %277 = vmatpush1.bf16.msra.mxu0 0
    %278 = vmatprep.subr.bf16.mxu0 0
    %279 = vmatpush1.bf16.msra.mxu0 0
    %280 = vmatprep.subr.bf16.mxu0 0
    %281 = vmatpush1.bf16.msra.mxu0 0
    %282 = vmatprep.mubr.bf16.mxu0 0
    %283 = vmatmul.mubr.bf16.gmra.mrb[0].mxu0 %v242
    %v284 = vpop.f32.mrb[0].mxu0
    %v285 = vadd.f32 0.0, %v284
    %v286 = vpop.f32.mrb[0].mxu0
    %v287 = vpop.f32.mrb[0].mxu0
    %v288 = vadd.f32 0.0, %v287
    %v289 = vpop.f32.mrb[0].mxu0
    %290 = vmatprep.mubr.bf16.mxu0 0
    %291 = vmatmul.mubr.bf16.gmra.mrb[0].mxu0 %v245
    %v292 = vpop.f32.mrb[0].mxu0
    %v293 = vadd.f32 0.0, %v292
    %v294 = vpop.f32.mrb[0].mxu0
    %v295 = vpop.f32.mrb[0].mxu0
    %v296 = vadd.f32 0.0, %v295
    %v297 = vpop.f32.mrb[0].mxu0
    %298 = vmatprep.mubr.bf16.mxu0 0
    %299 = vmatmul.mubr.bf16.gmra.mrb[0].mxu0 %v248
    %v300 = vpop.f32.mrb[0].mxu0
    %v301 = vadd.f32 0.0, %v300
    %v302 = vpop.f32.mrb[0].mxu0
    %v303 = vpop.f32.mrb[0].mxu0
    %v304 = vadd.f32 0.0, %v303
    %v305 = vpop.f32.mrb[0].mxu0
    %306 = vdwg.mxu0
    %v307 = vmul.f32 %v285, %v172
    %v308 = vmul.f32 %v288, %v173
    %v309 = vmul.f32 %v293, %v174
    %v310 = vmul.f32 %v296, %v175
    %v311 = vmul.f32 %v301, %v176
    %v312 = vmul.f32 %v304, %v177
    %v313 = vmul.f32 %v147, %v172
    %v314 = vmul.f32 %v148, %v173
    %v315 = vmul.f32 %v149, %v174
    %v316 = vmul.f32 %v150, %v175
    %v317 = vmul.f32 %v151, %v176
    %v318 = vmul.f32 %v152, %v177
    %v319 = vmul.f32 %v285, %v178
    %v320 = vmul.f32 %v288, %v179
    %v321 = vmul.f32 %v293, %v180
    %v322 = vmul.f32 %v296, %v181
    %v323 = vmul.f32 %v301, %v182
    %v324 = vmul.f32 %v304, %v183
    %v325 = vmul.f32 %v147, %v178
    %v326 = vmul.f32 %v148, %v179
    %v327 = vmul.f32 %v149, %v180
    %v328 = vmul.f32 %v150, %v181
    %v329 = vmul.f32 %v151, %v182
    %v330 = vmul.f32 %v152, %v183
    %337 = vrot.lane.b32.xlu0 %v313, 32
    %v338 = vpop.permute.xlu0 %337
    %339 = vrot.lane.b32.xlu0 %v314, 32
    %v340 = vpop.permute.xlu0 %339
    %341 = vrot.lane.b32.xlu0 %v315, 32
    %v342 = vpop.permute.xlu0 %341
    %343 = vrot.lane.b32.xlu0 %v316, 32
    %v344 = vpop.permute.xlu0 %343
    %345 = vrot.lane.b32.xlu0 %v317, 32
    %v346 = vpop.permute.xlu0 %345
    %347 = vrot.lane.b32.xlu0 %v318, 32
    %v348 = vpop.permute.xlu0 %347
    %361 = vrot.lane.b32.xlu0 %v319, 64
    %v362 = vpop.permute.xlu0 %361
    %363 = vrot.lane.b32.xlu0 %v320, 64
    %v364 = vpop.permute.xlu0 %363
    %365 = vrot.lane.b32.xlu0 %v321, 64
    %v366 = vpop.permute.xlu0 %365
    %367 = vrot.lane.b32.xlu0 %v322, 64
    %v368 = vpop.permute.xlu0 %367
    %369 = vrot.lane.b32.xlu0 %v323, 64
    %v370 = vpop.permute.xlu0 %369
    %371 = vrot.lane.b32.xlu0 %v324, 64
    %v372 = vpop.permute.xlu0 %371
    %385 = vrot.lane.b32.xlu0 %v325, 96
    %v386 = vpop.permute.xlu0 %385
    %387 = vrot.lane.b32.xlu0 %v326, 96
    %v388 = vpop.permute.xlu0 %387
    %389 = vrot.lane.b32.xlu0 %v327, 96
    %v390 = vpop.permute.xlu0 %389
    %391 = vrot.lane.b32.xlu0 %v328, 96
    %v392 = vpop.permute.xlu0 %391
    %393 = vrot.lane.b32.xlu0 %v329, 96
    %v394 = vpop.permute.xlu0 %393
    %395 = vrot.lane.b32.xlu0 %v330, 96
    %v396 = vpop.permute.xlu0 %395
    %v403 = vsel %vm68, %v307, %v338
    %v404 = vsel %vm68, %v308, %v340
    %v405 = vsel %vm68, %v309, %v342
    %v406 = vsel %vm68, %v310, %v344
    %v407 = vsel %vm68, %v311, %v346
    %v408 = vsel %vm68, %v312, %v348
    %vm409 = vcmask 523264
    %v410 = vsel %vm409, %v403, %v362
    %v411 = vsel %vm409, %v404, %v364
    %v412 = vsel %vm409, %v405, %v366
    %v413 = vsel %vm409, %v406, %v368
    %v414 = vsel %vm409, %v407, %v370
    %v415 = vsel %vm409, %v408, %v372
    %vm416 = vcmask 785408
    %v417 = vsel %vm416, %v410, %v386
    %v418 = vsel %vm416, %v411, %v388
    %v419 = vsel %vm416, %v412, %v390
    %v420 = vsel %vm416, %v413, %v392
    %v421 = vsel %vm416, %v414, %v394
    %v422 = vsel %vm416, %v415, %v396
    %v423 = vpack.c.bf16 %v418, %v417
    %v424 = vpack.c.bf16 %v420, %v419
    %v425 = vpack.c.bf16 %v422, %v421
    %v426 = vld [vmem:[%s3] sm:$0xf]
    %v427 = vld [vmem:[%s3 + $0x4] sm:$0xf]
    %v428 = vld [vmem:[%s3 + $0x8] sm:$0xf]
    %v429 = vld [vmem:[%s3 + $0xc] sm:$0xf]
    %v430 = vld [vmem:[%s3 + $0x10] sm:$0xf]
    %v431 = vld [vmem:[%s3 + $0x14] sm:$0xf]
    %v432 = vld [vmem:[%s3 + $0x18] sm:$0xf]
    %v433 = vld [vmem:[%s3 + $0x1c] sm:$0xf]
    %v434 = vld [vmem:[%s3 + $0x20] sm:$0xf]
    %v435 = vld [vmem:[%s3 + $0x24] sm:$0xf]
    %v436 = vld [vmem:[%s3 + $0x28] sm:$0xf]
    %v437 = vld [vmem:[%s3 + $0x2c] sm:$0xf]
    %v438 = vld [vmem:[%s3 + $0x30] sm:$0xf]
    %v439 = vld [vmem:[%s3 + $0x34] sm:$0xf]
    %v440 = vld [vmem:[%s3 + $0x38] sm:$0xf]
    %v441 = vld [vmem:[%s3 + $0x3c] sm:$0xf]
    %s442 = scalar_lea.vmem %s4, 48
    %v443 = vld [vmem:[%s442] sm:$0xff]
    %v444 = vld [vmem:[%s442 + $0x8] sm:$0xff]
    %v445 = vld [vmem:[%s442 + $0x10] sm:$0xff]
    %v446 = vld [vmem:[%s442 + $0x18] sm:$0xff]
    %v447 = vld [vmem:[%s442 + $0x20] sm:$0xff]
    %v448 = vld [vmem:[%s442 + $0x28] sm:$0xff]
    %v465 = vunpack.c.l.b16 %v426
    %v466 = vunpack.c.l.b16 %v427
    %v467 = vunpack.c.l.b16 %v428
    %v468 = vunpack.c.l.b16 %v429
    %v469 = vunpack.c.l.b16 %v430
    %v470 = vunpack.c.l.b16 %v431
    %v471 = vunpack.c.l.b16 %v432
    %v472 = vunpack.c.l.b16 %v433
    %v473 = vunpack.c.l.b16 %v434
    %v474 = vunpack.c.l.b16 %v435
    %v475 = vunpack.c.l.b16 %v436
    %v476 = vunpack.c.l.b16 %v437
    %v477 = vunpack.c.l.b16 %v438
    %v478 = vunpack.c.l.b16 %v439
    %v479 = vunpack.c.l.b16 %v440
    %v480 = vunpack.c.l.b16 %v441
    %v481 = vpack.c.b16 %v466, %v465
    %v482 = vpack.c.b16 %v468, %v467
    %v483 = vpack.c.b16 %v470, %v469
    %v484 = vpack.c.b16 %v472, %v471
    %v485 = vpack.c.b16 %v474, %v473
    %v486 = vpack.c.b16 %v476, %v475
    %v487 = vpack.c.b16 %v478, %v477
    %v488 = vpack.c.b16 %v480, %v479
    %497 = vmatprep.subr.bf16.mxu0 0
    %498 = vmatpush1.bf16.msra.mxu0 %v481
    %499 = vmatprep.subr.bf16.mxu0 0
    %500 = vmatpush1.bf16.msra.mxu0 %v482
    %501 = vmatprep.subr.bf16.mxu0 0
    %502 = vmatpush1.bf16.msra.mxu0 %v483
    %503 = vmatprep.subr.bf16.mxu0 0
    %504 = vmatpush1.bf16.msra.mxu0 %v484
    %505 = vmatprep.subr.bf16.mxu0 0
    %506 = vmatpush1.bf16.msra.mxu0 %v485
    %507 = vmatprep.subr.bf16.mxu0 0
    %508 = vmatpush1.bf16.msra.mxu0 %v486
    %509 = vmatprep.subr.bf16.mxu0 0
    %510 = vmatpush1.bf16.msra.mxu0 %v487
    %511 = vmatprep.subr.bf16.mxu0 0
    %512 = vmatpush1.bf16.msra.mxu0 %v488
    %513 = vmatprep.subr.bf16.mxu0 0
    %514 = vmatpush1.bf16.msra.mxu0 0
    %515 = vmatprep.subr.bf16.mxu0 0
    %516 = vmatpush1.bf16.msra.mxu0 0
    %517 = vmatprep.subr.bf16.mxu0 0
    %518 = vmatpush1.bf16.msra.mxu0 0
    %519 = vmatprep.subr.bf16.mxu0 0
    %520 = vmatpush1.bf16.msra.mxu0 0
    %521 = vmatprep.subr.bf16.mxu0 0
    %522 = vmatpush1.bf16.msra.mxu0 0
    %523 = vmatprep.subr.bf16.mxu0 0
    %524 = vmatpush1.bf16.msra.mxu0 0
    %525 = vmatprep.subr.bf16.mxu0 0
    %526 = vmatpush1.bf16.msra.mxu0 0
    %527 = vmatprep.subr.bf16.mxu0 0
    %528 = vmatpush1.bf16.msra.mxu0 0
    %529 = vmatprep.mubr.bf16.mxu0 0
    %530 = vmatmul.mubr.bf16.gmra.mrb[0].mxu0 %v423
    %v531 = vpop.f32.mrb[0].mxu0
    %v532 = vadd.f32 %v443, %v531
    %v533 = vpop.f32.mrb[0].mxu0
    %v534 = vpop.f32.mrb[0].mxu0
    %v535 = vadd.f32 %v444, %v534
    %v536 = vpop.f32.mrb[0].mxu0
    %537 = vmatprep.mubr.bf16.mxu0 0
    %538 = vmatmul.mubr.bf16.gmra.mrb[0].mxu0 %v424
    %v539 = vpop.f32.mrb[0].mxu0
    %v540 = vadd.f32 %v445, %v539
    %v541 = vpop.f32.mrb[0].mxu0
    %v542 = vpop.f32.mrb[0].mxu0
    %v543 = vadd.f32 %v446, %v542
    %v544 = vpop.f32.mrb[0].mxu0
    %545 = vmatprep.mubr.bf16.mxu0 0
    %546 = vmatmul.mubr.bf16.gmra.mrb[0].mxu0 %v425
    %v547 = vpop.f32.mrb[0].mxu0
    %v548 = vadd.f32 %v447, %v547
    %v549 = vpop.f32.mrb[0].mxu0
    %v550 = vpop.f32.mrb[0].mxu0
    %v551 = vadd.f32 %v448, %v550
    %v552 = vpop.f32.mrb[0].mxu0
    %553 = vdwg.mxu0
    %v554 = vmax.f32 %v532, 0.0
    %v555 = vmax.f32 %v535, 0.0
    %v556 = vmax.f32 %v540, 0.0
    %v557 = vmax.f32 %v543, 0.0
    %v558 = vmax.f32 %v548, 0.0
    %v559 = vmax.f32 %v551, 0.0
    %v560 = vpack.c.bf16 %v555, %v554
    %v561 = vpack.c.bf16 %v557, %v556
    %v562 = vpack.c.bf16 %v559, %v558
    %563 = vmatprep.subr.bf16.mxu0 0
    %564 = vmatpush1.bf16.msra.mxu0 %v560
    %565 = vmatprep.subr.bf16.mxu0 0
    %566 = vmatpush1.bf16.msra.mxu0 %v561
    %567 = vmatprep.subr.bf16.mxu0 0
    %568 = vmatpush1.bf16.msra.mxu0 %v562
    %569 = vmatprep.subr.bf16.mxu0 0
    %570 = vmatpush1.bf16.msra.mxu0 0
    %571 = vmatprep.subr.bf16.mxu0 0
    %572 = vmatpush1.bf16.msra.mxu0 0
    %573 = vmatprep.subr.bf16.mxu0 0
    %574 = vmatpush1.bf16.msra.mxu0 0
    %575 = vmatprep.subr.bf16.mxu0 0
    %576 = vmatpush1.bf16.msra.mxu0 0
    %577 = vmatprep.subr.bf16.mxu0 0
    %578 = vmatpush1.bf16.msra.mxu0 0
    %579 = vmatprep.subr.bf16.mxu0 0
    %580 = vmatpush1.bf16.msra.mxu0 0
    %581 = vmatprep.subr.bf16.mxu0 0
    %582 = vmatpush1.bf16.msra.mxu0 0
    %583 = vmatprep.subr.bf16.mxu0 0
    %584 = vmatpush1.bf16.msra.mxu0 0
    %585 = vmatprep.subr.bf16.mxu0 0
    %586 = vmatpush1.bf16.msra.mxu0 0
    %587 = vmatprep.subr.bf16.mxu0 0
    %588 = vmatpush1.bf16.msra.mxu0 0
    %589 = vmatprep.subr.bf16.mxu0 0
    %590 = vmatpush1.bf16.msra.mxu0 0
    %591 = vmatprep.subr.bf16.mxu0 0
    %592 = vmatpush1.bf16.msra.mxu0 0
    %593 = vmatprep.subr.bf16.mxu0 0
    %594 = vmatpush1.bf16.msra.mxu0 0
    %595 = vmatprep.mubr.bf16.mxu0 0
    %596 = vmatmul.mubr.bf16.gmra.mrb[0].mxu0 %v242
    %v597 = vpop.f32.mrb[0].mxu0
    %v598 = vadd.f32 0.0, %v597
    %v599 = vpop.f32.mrb[0].mxu0
    %v600 = vpop.f32.mrb[0].mxu0
    %v601 = vadd.f32 0.0, %v600
    %v602 = vpop.f32.mrb[0].mxu0
    %603 = vmatprep.mubr.bf16.mxu0 0
    %604 = vmatmul.mubr.bf16.gmra.mrb[0].mxu0 %v245
    %v605 = vpop.f32.mrb[0].mxu0
    %v606 = vadd.f32 0.0, %v605
    %v607 = vpop.f32.mrb[0].mxu0
    %v608 = vpop.f32.mrb[0].mxu0
    %v609 = vadd.f32 0.0, %v608
    %v610 = vpop.f32.mrb[0].mxu0
    %611 = vmatprep.mubr.bf16.mxu0 0
    %612 = vmatmul.mubr.bf16.gmra.mrb[0].mxu0 %v248
    %v613 = vpop.f32.mrb[0].mxu0
    %v614 = vadd.f32 0.0, %v613
    %v615 = vpop.f32.mrb[0].mxu0
    %v616 = vpop.f32.mrb[0].mxu0
    %v617 = vadd.f32 0.0, %v616
    %v618 = vpop.f32.mrb[0].mxu0
    %619 = vdwg.mxu0
    %v620 = vmul.f32 %v598, %v172
    %v621 = vmul.f32 %v601, %v173
    %v622 = vmul.f32 %v606, %v174
    %v623 = vmul.f32 %v609, %v175
    %v624 = vmul.f32 %v614, %v176
    %v625 = vmul.f32 %v617, %v177
    %v626 = vmul.f32 %v554, %v172
    %v627 = vmul.f32 %v555, %v173
    %v628 = vmul.f32 %v556, %v174
    %v629 = vmul.f32 %v557, %v175
    %v630 = vmul.f32 %v558, %v176
    %v631 = vmul.f32 %v559, %v177
    %v632 = vmul.f32 %v598, %v178
    %v633 = vmul.f32 %v601, %v179
    %v634 = vmul.f32 %v606, %v180
    %v635 = vmul.f32 %v609, %v181
    %v636 = vmul.f32 %v614, %v182
    %v637 = vmul.f32 %v617, %v183
    %v638 = vmul.f32 %v554, %v178
    %v639 = vmul.f32 %v555, %v179
    %v640 = vmul.f32 %v556, %v180
    %v641 = vmul.f32 %v557, %v181
    %v642 = vmul.f32 %v558, %v182
    %v643 = vmul.f32 %v559, %v183
    %650 = vrot.lane.b32.xlu0 %v626, 32
    %v651 = vpop.permute.xlu0 %650
    %652 = vrot.lane.b32.xlu0 %v627, 32
    %v653 = vpop.permute.xlu0 %652
    %654 = vrot.lane.b32.xlu0 %v628, 32
    %v655 = vpop.permute.xlu0 %654
    %656 = vrot.lane.b32.xlu0 %v629, 32
    %v657 = vpop.permute.xlu0 %656
    %658 = vrot.lane.b32.xlu0 %v630, 32
    %v659 = vpop.permute.xlu0 %658
    %660 = vrot.lane.b32.xlu0 %v631, 32
    %v661 = vpop.permute.xlu0 %660
    %674 = vrot.lane.b32.xlu0 %v632, 64
    %v675 = vpop.permute.xlu0 %674
    %676 = vrot.lane.b32.xlu0 %v633, 64
    %v677 = vpop.permute.xlu0 %676
    %678 = vrot.lane.b32.xlu0 %v634, 64
    %v679 = vpop.permute.xlu0 %678
    %680 = vrot.lane.b32.xlu0 %v635, 64
    %v681 = vpop.permute.xlu0 %680
    %682 = vrot.lane.b32.xlu0 %v636, 64
    %v683 = vpop.permute.xlu0 %682
    %684 = vrot.lane.b32.xlu0 %v637, 64
    %v685 = vpop.permute.xlu0 %684
    %698 = vrot.lane.b32.xlu0 %v638, 96
    %v699 = vpop.permute.xlu0 %698
    %700 = vrot.lane.b32.xlu0 %v639, 96
    %v701 = vpop.permute.xlu0 %700
    %702 = vrot.lane.b32.xlu0 %v640, 96
    %v703 = vpop.permute.xlu0 %702
    %704 = vrot.lane.b32.xlu0 %v641, 96
    %v705 = vpop.permute.xlu0 %704
    %706 = vrot.lane.b32.xlu0 %v642, 96
    %v707 = vpop.permute.xlu0 %706
    %708 = vrot.lane.b32.xlu0 %v643, 96
    %v709 = vpop.permute.xlu0 %708
    %v716 = vsel %vm68, %v620, %v651
    %v717 = vsel %vm68, %v621, %v653
    %v718 = vsel %vm68, %v622, %v655
    %v719 = vsel %vm68, %v623, %v657
    %v720 = vsel %vm68, %v624, %v659
    %v721 = vsel %vm68, %v625, %v661
    %v722 = vsel %vm409, %v716, %v675
    %v723 = vsel %vm409, %v717, %v677
    %v724 = vsel %vm409, %v718, %v679
    %v725 = vsel %vm409, %v719, %v681
    %v726 = vsel %vm409, %v720, %v683
    %v727 = vsel %vm409, %v721, %v685
    %v728 = vsel %vm416, %v722, %v699
    %v729 = vsel %vm416, %v723, %v701
    %v730 = vsel %vm416, %v724, %v703
    %v731 = vsel %vm416, %v725, %v705
    %v732 = vsel %vm416, %v726, %v707
    %v733 = vsel %vm416, %v727, %v709
    %v734 = vpack.c.bf16 %v729, %v728
    %v735 = vpack.c.bf16 %v731, %v730
    %v736 = vpack.c.bf16 %v733, %v732
    %s737 = scalar_lea.vmem %s3, 64
    %v738 = vld [vmem:[%s737] sm:$0xf]
    %v739 = vld [vmem:[%s737 + $0x4] sm:$0xf]
    %v740 = vld [vmem:[%s737 + $0x8] sm:$0xf]
    %v741 = vld [vmem:[%s737 + $0xc] sm:$0xf]
    %v742 = vld [vmem:[%s737 + $0x10] sm:$0xf]
    %v743 = vld [vmem:[%s737 + $0x14] sm:$0xf]
    %v744 = vld [vmem:[%s737 + $0x18] sm:$0xf]
    %v745 = vld [vmem:[%s737 + $0x1c] sm:$0xf]
    %v746 = vld [vmem:[%s737 + $0x20] sm:$0xf]
    %v747 = vld [vmem:[%s737 + $0x24] sm:$0xf]
    %v748 = vld [vmem:[%s737 + $0x28] sm:$0xf]
    %v749 = vld [vmem:[%s737 + $0x2c] sm:$0xf]
    %v750 = vld [vmem:[%s737 + $0x30] sm:$0xf]
    %v751 = vld [vmem:[%s737 + $0x34] sm:$0xf]
    %v752 = vld [vmem:[%s737 + $0x38] sm:$0xf]
    %v753 = vld [vmem:[%s737 + $0x3c] sm:$0xf]
    %s754 = scalar_lea.vmem %s4, 96
    %v755 = vld [vmem:[%s754] sm:$0xff]
    %v756 = vld [vmem:[%s754 + $0x8] sm:$0xff]
    %v757 = vld [vmem:[%s754 + $0x10] sm:$0xff]
    %v758 = vld [vmem:[%s754 + $0x18] sm:$0xff]
    %v759 = vld [vmem:[%s754 + $0x20] sm:$0xff]
    %v760 = vld [vmem:[%s754 + $0x28] sm:$0xff]
    %v777 = vunpack.c.l.b16 %v738
    %v778 = vunpack.c.l.b16 %v739
    %v779 = vunpack.c.l.b16 %v740
    %v780 = vunpack.c.l.b16 %v741
    %v781 = vunpack.c.l.b16 %v742
    %v782 = vunpack.c.l.b16 %v743
    %v783 = vunpack.c.l.b16 %v744
    %v784 = vunpack.c.l.b16 %v745
    %v785 = vunpack.c.l.b16 %v746
    %v786 = vunpack.c.l.b16 %v747
    %v787 = vunpack.c.l.b16 %v748
    %v788 = vunpack.c.l.b16 %v749
    %v789 = vunpack.c.l.b16 %v750
    %v790 = vunpack.c.l.b16 %v751
    %v791 = vunpack.c.l.b16 %v752
    %v792 = vunpack.c.l.b16 %v753
    %v793 = vpack.c.b16 %v778, %v777
    %v794 = vpack.c.b16 %v780, %v779
    %v795 = vpack.c.b16 %v782, %v781
    %v796 = vpack.c.b16 %v784, %v783
    %v797 = vpack.c.b16 %v786, %v785
    %v798 = vpack.c.b16 %v788, %v787
    %v799 = vpack.c.b16 %v790, %v789
    %v800 = vpack.c.b16 %v792, %v791
    %809 = vmatprep.subr.bf16.mxu0 0
    %810 = vmatpush1.bf16.msra.mxu0 %v793
    %811 = vmatprep.subr.bf16.mxu0 0
    %812 = vmatpush1.bf16.msra.mxu0 %v794
    %813 = vmatprep.subr.bf16.mxu0 0
    %814 = vmatpush1.bf16.msra.mxu0 %v795
    %815 = vmatprep.subr.bf16.mxu0 0
    %816 = vmatpush1.bf16.msra.mxu0 %v796
    %817 = vmatprep.subr.bf16.mxu0 0
    %818 = vmatpush1.bf16.msra.mxu0 %v797
    %819 = vmatprep.subr.bf16.mxu0 0
    %820 = vmatpush1.bf16.msra.mxu0 %v798
    %821 = vmatprep.subr.bf16.mxu0 0
    %822 = vmatpush1.bf16.msra.mxu0 %v799
    %823 = vmatprep.subr.bf16.mxu0 0
    %824 = vmatpush1.bf16.msra.mxu0 %v800
    %825 = vmatprep.subr.bf16.mxu0 0
    %826 = vmatpush1.bf16.msra.mxu0 0
    %827 = vmatprep.subr.bf16.mxu0 0
    %828 = vmatpush1.bf16.msra.mxu0 0
    %829 = vmatprep.subr.bf16.mxu0 0
    %830 = vmatpush1.bf16.msra.mxu0 0
    %831 = vmatprep.subr.bf16.mxu0 0
    %832 = vmatpush1.bf16.msra.mxu0 0
    %833 = vmatprep.subr.bf16.mxu0 0
    %834 = vmatpush1.bf16.msra.mxu0 0
    %835 = vmatprep.subr.bf16.mxu0 0
    %836 = vmatpush1.bf16.msra.mxu0 0
    %837 = vmatprep.subr.bf16.mxu0 0
    %838 = vmatpush1.bf16.msra.mxu0 0
    %839 = vmatprep.subr.bf16.mxu0 0
    %840 = vmatpush1.bf16.msra.mxu0 0
    %841 = vmatprep.mubr.bf16.mxu0 0
    %842 = vmatmul.mubr.bf16.gmra.mrb[0].mxu0 %v734
    %v843 = vpop.f32.mrb[0].mxu0
    %v844 = vadd.f32 %v755, %v843
    %v845 = vpop.f32.mrb[0].mxu0
    %v846 = vpop.f32.mrb[0].mxu0
    %v847 = vadd.f32 %v756, %v846
    %v848 = vpop.f32.mrb[0].mxu0
    %849 = vmatprep.mubr.bf16.mxu0 0
    %850 = vmatmul.mubr.bf16.gmra.mrb[0].mxu0 %v735
    %v851 = vpop.f32.mrb[0].mxu0
    %v852 = vadd.f32 %v757, %v851
    %v853 = vpop.f32.mrb[0].mxu0
    %v854 = vpop.f32.mrb[0].mxu0
    %v855 = vadd.f32 %v758, %v854
    %v856 = vpop.f32.mrb[0].mxu0
    %857 = vmatprep.mubr.bf16.mxu0 0
    %858 = vmatmul.mubr.bf16.gmra.mrb[0].mxu0 %v736
    %v859 = vpop.f32.mrb[0].mxu0
    %v860 = vadd.f32 %v759, %v859
    %v861 = vpop.f32.mrb[0].mxu0
    %v862 = vpop.f32.mrb[0].mxu0
    %v863 = vadd.f32 %v760, %v862
    %v864 = vpop.f32.mrb[0].mxu0
    %865 = vdwg.mxu0
    %v866 = vpack.c.bf16 %v847, %v844
    %v867 = vpack.c.bf16 %v855, %v852
    %v868 = vpack.c.bf16 %v863, %v860
    %v901 = vunpack.c.l.b16 %v190
    %v902 = vunpack.c.l.b16 %v191
    %v903 = vunpack.c.l.b16 %v192
    %v904 = vunpack.c.l.b16 %v193
    %v905 = vunpack.c.l.b16 %v194
    %v906 = vunpack.c.l.b16 %v195
    %v907 = vunpack.c.l.b16 %v196
    %v908 = vunpack.c.l.b16 %v197
    %v909 = vunpack.c.l.b16 %v198
    %v910 = vunpack.c.l.b16 %v199
    %v911 = vunpack.c.l.b16 %v200
    %v912 = vunpack.c.l.b16 %v201
    %v913 = vunpack.c.l.b16 %v202
    %v914 = vunpack.c.l.b16 %v203
    %v915 = vunpack.c.l.b16 %v204
    %v916 = vunpack.c.l.b16 %v205
    %v917 = vunpack.c.l.b16 %v206
    %v918 = vunpack.c.l.b16 %v207
    %v919 = vunpack.c.l.b16 %v208
    %v920 = vunpack.c.l.b16 %v209
    %v921 = vunpack.c.l.b16 %v210
    %v922 = vunpack.c.l.b16 %v211
    %v923 = vunpack.c.l.b16 %v212
    %v924 = vunpack.c.l.b16 %v213
    %v925 = vunpack.c.l.b16 %v214
    %v926 = vunpack.c.l.b16 %v215
    %v927 = vunpack.c.l.b16 %v216
    %v928 = vunpack.c.l.b16 %v217
    %v929 = vunpack.c.l.b16 %v218
    %v930 = vunpack.c.l.b16 %v219
    %v931 = vunpack.c.l.b16 %v220
    %v932 = vunpack.c.l.b16 %v221
    %v933 = vpack.c.b16 %v902, %v901
    %v934 = vpack.c.b16 %v904, %v903
    %v935 = vpack.c.b16 %v906, %v905
    %v936 = vpack.c.b16 %v908, %v907
    %v937 = vpack.c.b16 %v910, %v909
    %v938 = vpack.c.b16 %v912, %v911
    %v939 = vpack.c.b16 %v914, %v913
    %v940 = vpack.c.b16 %v916, %v915
    %v941 = vpack.c.b16 %v918, %v917
    %v942 = vpack.c.b16 %v920, %v919
    %v943 = vpack.c.b16 %v922, %v921
    %v944 = vpack.c.b16 %v924, %v923
    %v945 = vpack.c.b16 %v926, %v925
    %v946 = vpack.c.b16 %v928, %v927
    %v947 = vpack.c.b16 %v930, %v929
    %v948 = vpack.c.b16 %v932, %v931
    %v950 = vsel %vm240, %v933, 0
    %v953 = vsel %vm240, %v934, 0
    %v956 = vsel %vm240, %v935, 0
    %v959 = vsel %vm240, %v936, 0
    %v962 = vsel %vm240, %v937, 0
    %v965 = vsel %vm240, %v938, 0
    %v968 = vsel %vm240, %v939, 0
    %v971 = vsel %vm240, %v940, 0
    %v974 = vsel %vm240, %v941, 0
    %v977 = vsel %vm240, %v942, 0
    %v980 = vsel %vm240, %v943, 0
    %v983 = vsel %vm240, %v944, 0
    %v986 = vsel %vm240, %v945, 0
    %v989 = vsel %vm240, %v946, 0
    %v992 = vsel %vm240, %v947, 0
    %v995 = vsel %vm240, %v948, 0
    %997 = vmatprep.subr.bf16.mxu0 0
    %998 = vmatpush1.bf16.msra.mxu0 %v866
    %999 = vmatprep.subr.bf16.mxu0 0
    %1000 = vmatpush1.bf16.msra.mxu0 %v867
    %1001 = vmatprep.subr.bf16.mxu0 0
    %1002 = vmatpush1.bf16.msra.mxu0 %v868
    %1003 = vmatprep.subr.bf16.mxu0 0
    %1004 = vmatpush1.bf16.msra.mxu0 0
    %1005 = vmatprep.subr.bf16.mxu0 0
    %1006 = vmatpush1.bf16.msra.mxu0 0
    %1007 = vmatprep.subr.bf16.mxu0 0
    %1008 = vmatpush1.bf16.msra.mxu0 0
    %1009 = vmatprep.subr.bf16.mxu0 0
    %1010 = vmatpush1.bf16.msra.mxu0 0
    %1011 = vmatprep.subr.bf16.mxu0 0
    %1012 = vmatpush1.bf16.msra.mxu0 0
    %1013 = vmatprep.subr.bf16.mxu0 0
    %1014 = vmatpush1.bf16.msra.mxu0 0
    %1015 = vmatprep.subr.bf16.mxu0 0
    %1016 = vmatpush1.bf16.msra.mxu0 0
    %1017 = vmatprep.subr.bf16.mxu0 0
    %1018 = vmatpush1.bf16.msra.mxu0 0
    %1019 = vmatprep.subr.bf16.mxu0 0
    %1020 = vmatpush1.bf16.msra.mxu0 0
    %1021 = vmatprep.subr.bf16.mxu0 0
    %1022 = vmatpush1.bf16.msra.mxu0 0
    %1023 = vmatprep.subr.bf16.mxu0 0
    %1024 = vmatpush1.bf16.msra.mxu0 0
    %1025 = vmatprep.subr.bf16.mxu0 0
    %1026 = vmatpush1.bf16.msra.mxu0 0
    %1027 = vmatprep.subr.bf16.mxu0 0
    %1028 = vmatpush1.bf16.msra.mxu0 0
    %1029 = vmatprep.mubr.bf16.mxu0 0
    %1030 = vmatmul.mubr.bf16.gmra.mrb[0].mxu0 %v950
    %v1031 = vpop.f32.mrb[0].mxu0
    %v1032 = vadd.f32 0.0, %v1031
    %v1033 = vpop.f32.mrb[0].mxu0
    %v1034 = vpop.f32.mrb[0].mxu0
    %v1035 = vadd.f32 0.0, %v1034
    %v1036 = vpop.f32.mrb[0].mxu0
    %1037 = vmatprep.mubr.bf16.mxu0 0
    %1038 = vmatmul.mubr.bf16.gmra.mrb[0].mxu0 %v953
    %v1039 = vpop.f32.mrb[0].mxu0
    %v1040 = vadd.f32 0.0, %v1039
    %v1041 = vpop.f32.mrb[0].mxu0
    %v1042 = vpop.f32.mrb[0].mxu0
    %v1043 = vadd.f32 0.0, %v1042
    %v1044 = vpop.f32.mrb[0].mxu0
    %1045 = vmatprep.mubr.bf16.mxu0 0
    %1046 = vmatmul.mubr.bf16.gmra.mrb[0].mxu0 %v956
    %v1047 = vpop.f32.mrb[0].mxu0
    %v1048 = vadd.f32 0.0, %v1047
    %v1049 = vpop.f32.mrb[0].mxu0
    %v1050 = vpop.f32.mrb[0].mxu0
    %v1051 = vadd.f32 0.0, %v1050
    %v1052 = vpop.f32.mrb[0].mxu0
    %1053 = vmatprep.mubr.bf16.mxu0 0
    %1054 = vmatmul.mubr.bf16.gmra.mrb[0].mxu0 %v959
    %v1055 = vpop.f32.mrb[0].mxu0
    %v1056 = vadd.f32 0.0, %v1055
    %v1057 = vpop.f32.mrb[0].mxu0
    %v1058 = vpop.f32.mrb[0].mxu0
    %v1059 = vadd.f32 0.0, %v1058
    %v1060 = vpop.f32.mrb[0].mxu0
    %1061 = vmatprep.mubr.bf16.mxu0 0
    %1062 = vmatmul.mubr.bf16.gmra.mrb[0].mxu0 %v962
    %v1063 = vpop.f32.mrb[0].mxu0
    %v1064 = vadd.f32 0.0, %v1063
    %v1065 = vpop.f32.mrb[0].mxu0
    %v1066 = vpop.f32.mrb[0].mxu0
    %v1067 = vadd.f32 0.0, %v1066
    %v1068 = vpop.f32.mrb[0].mxu0
    %1069 = vmatprep.mubr.bf16.mxu0 0
    %1070 = vmatmul.mubr.bf16.gmra.mrb[0].mxu0 %v965
    %v1071 = vpop.f32.mrb[0].mxu0
    %v1072 = vadd.f32 0.0, %v1071
    %v1073 = vpop.f32.mrb[0].mxu0
    %v1074 = vpop.f32.mrb[0].mxu0
    %v1075 = vadd.f32 0.0, %v1074
    %v1076 = vpop.f32.mrb[0].mxu0
    %1077 = vmatprep.mubr.bf16.mxu0 0
    %1078 = vmatmul.mubr.bf16.gmra.mrb[0].mxu0 %v968
    %v1079 = vpop.f32.mrb[0].mxu0
    %v1080 = vadd.f32 0.0, %v1079
    %v1081 = vpop.f32.mrb[0].mxu0
    %v1082 = vpop.f32.mrb[0].mxu0
    %v1083 = vadd.f32 0.0, %v1082
    %v1084 = vpop.f32.mrb[0].mxu0
    %1085 = vmatprep.mubr.bf16.mxu0 0
    %1086 = vmatmul.mubr.bf16.gmra.mrb[0].mxu0 %v971
    %v1087 = vpop.f32.mrb[0].mxu0
    %v1088 = vadd.f32 0.0, %v1087
    %v1089 = vpop.f32.mrb[0].mxu0
    %v1090 = vpop.f32.mrb[0].mxu0
    %v1091 = vadd.f32 0.0, %v1090
    %v1092 = vpop.f32.mrb[0].mxu0
    %1093 = vmatprep.mubr.bf16.mxu0 0
    %1094 = vmatmul.mubr.bf16.gmra.mrb[0].mxu0 %v974
    %v1095 = vpop.f32.mrb[0].mxu0
    %v1096 = vadd.f32 0.0, %v1095
    %v1097 = vpop.f32.mrb[0].mxu0
    %v1098 = vpop.f32.mrb[0].mxu0
    %v1099 = vadd.f32 0.0, %v1098
    %v1100 = vpop.f32.mrb[0].mxu0
    %1101 = vmatprep.mubr.bf16.mxu0 0
    %1102 = vmatmul.mubr.bf16.gmra.mrb[0].mxu0 %v977
    %v1103 = vpop.f32.mrb[0].mxu0
    %v1104 = vadd.f32 0.0, %v1103
    %v1105 = vpop.f32.mrb[0].mxu0
    %v1106 = vpop.f32.mrb[0].mxu0
    %v1107 = vadd.f32 0.0, %v1106
    %v1108 = vpop.f32.mrb[0].mxu0
    %1109 = vmatprep.mubr.bf16.mxu0 0
    %1110 = vmatmul.mubr.bf16.gmra.mrb[0].mxu0 %v980
    %v1111 = vpop.f32.mrb[0].mxu0
    %v1112 = vadd.f32 0.0, %v1111
    %v1113 = vpop.f32.mrb[0].mxu0
    %v1114 = vpop.f32.mrb[0].mxu0
    %v1115 = vadd.f32 0.0, %v1114
    %v1116 = vpop.f32.mrb[0].mxu0
    %1117 = vmatprep.mubr.bf16.mxu0 0
    %1118 = vmatmul.mubr.bf16.gmra.mrb[0].mxu0 %v983
    %v1119 = vpop.f32.mrb[0].mxu0
    %v1120 = vadd.f32 0.0, %v1119
    %v1121 = vpop.f32.mrb[0].mxu0
    %v1122 = vpop.f32.mrb[0].mxu0
    %v1123 = vadd.f32 0.0, %v1122
    %v1124 = vpop.f32.mrb[0].mxu0
    %1125 = vmatprep.mubr.bf16.mxu0 0
    %1126 = vmatmul.mubr.bf16.gmra.mrb[0].mxu0 %v986
    %v1127 = vpop.f32.mrb[0].mxu0
    %v1128 = vadd.f32 0.0, %v1127
    %v1129 = vpop.f32.mrb[0].mxu0
    %v1130 = vpop.f32.mrb[0].mxu0
    %v1131 = vadd.f32 0.0, %v1130
    %v1132 = vpop.f32.mrb[0].mxu0
    %1133 = vmatprep.mubr.bf16.mxu0 0
    %1134 = vmatmul.mubr.bf16.gmra.mrb[0].mxu0 %v989
    %v1135 = vpop.f32.mrb[0].mxu0
    %v1136 = vadd.f32 0.0, %v1135
    %v1137 = vpop.f32.mrb[0].mxu0
    %v1138 = vpop.f32.mrb[0].mxu0
    %v1139 = vadd.f32 0.0, %v1138
    %v1140 = vpop.f32.mrb[0].mxu0
    %1141 = vmatprep.mubr.bf16.mxu0 0
    %1142 = vmatmul.mubr.bf16.gmra.mrb[0].mxu0 %v992
    %v1143 = vpop.f32.mrb[0].mxu0
    %v1144 = vadd.f32 0.0, %v1143
    %v1145 = vpop.f32.mrb[0].mxu0
    %v1146 = vpop.f32.mrb[0].mxu0
    %v1147 = vadd.f32 0.0, %v1146
    %v1148 = vpop.f32.mrb[0].mxu0
    %1149 = vmatprep.mubr.bf16.mxu0 0
    %1150 = vmatmul.mubr.bf16.gmra.mrb[0].mxu0 %v995
    %v1151 = vpop.f32.mrb[0].mxu0
    %v1152 = vadd.f32 0.0, %v1151
    %v1153 = vpop.f32.mrb[0].mxu0
    %v1154 = vpop.f32.mrb[0].mxu0
    %v1155 = vadd.f32 0.0, %v1154
    %v1156 = vpop.f32.mrb[0].mxu0
    %1157 = vdwg.mxu0
    %v1158 = vmul.f32 %v1032, %v1096
    %v1159 = vmul.f32 %v1035, %v1099
    %v1160 = vmul.f32 %v1040, %v1104
    %v1161 = vmul.f32 %v1043, %v1107
    %v1162 = vmul.f32 %v1048, %v1112
    %v1163 = vmul.f32 %v1051, %v1115
    %v1164 = vmul.f32 %v1056, %v1120
    %v1165 = vmul.f32 %v1059, %v1123
    %v1166 = vmul.f32 %v1064, %v1128
    %v1167 = vmul.f32 %v1067, %v1131
    %v1168 = vmul.f32 %v1072, %v1136
    %v1169 = vmul.f32 %v1075, %v1139
    %v1170 = vmul.f32 %v1080, %v1144
    %v1171 = vmul.f32 %v1083, %v1147
    %v1172 = vmul.f32 %v1088, %v1152
    %v1173 = vmul.f32 %v1091, %v1155
    %v1175 = vsel %vm68, 1.0, 0
    %v1178 = vsel %vm68, %v1158, 0
    %v1181 = vsel %vm68, %v1159, 0
    %v1184 = vsel %vm68, %v1160, 0
    %v1187 = vsel %vm68, %v1161, 0
    %v1190 = vsel %vm68, %v1162, 0
    %v1193 = vsel %vm68, %v1163, 0
    %v1196 = vsel %vm68, %v1164, 0
    %v1199 = vsel %vm68, %v1165, 0
    %v1202 = vsel %vm68, %v1166, 0
    %v1205 = vsel %vm68, %v1167, 0
    %v1208 = vsel %vm68, %v1168, 0
    %v1211 = vsel %vm68, %v1169, 0
    %v1214 = vsel %vm68, %v1170, 0
    %v1217 = vsel %vm68, %v1171, 0
    %v1220 = vsel %vm68, %v1172, 0
    %v1223 = vsel %vm68, %v1173, 0
    %1225 = vmatprep.subr.mxu0 0.0
    %1226 = vmatpush1.xpose.msra.mxu0 %v1178
    %1227 = vmatprep.subr.mxu0 0.0
    %1228 = vmatpush1.xpose.msra.mxu0 %v1181
    %1229 = vmatprep.subr.mxu0 0.0
    %1230 = vmatpush1.xpose.msra.mxu0 %v1184
    %1231 = vmatprep.subr.mxu0 0.0
    %1232 = vmatpush1.xpose.msra.mxu0 %v1187
    %1233 = vmatprep.subr.mxu0 0.0
    %1234 = vmatpush1.xpose.msra.mxu0 %v1190
    %1235 = vmatprep.subr.mxu0 0.0
    %1236 = vmatpush1.xpose.msra.mxu0 %v1193
    %1237 = vmatprep.subr.mxu0 0.0
    %1238 = vmatpush1.xpose.msra.mxu0 %v1196
    %1239 = vmatprep.subr.mxu0 0.0
    %1240 = vmatpush1.xpose.msra.mxu0 %v1199
    %1241 = vmatprep.subr.mxu0 0.0
    %1242 = vmatpush1.xpose.msra.mxu0 %v1202
    %1243 = vmatprep.subr.mxu0 0.0
    %1244 = vmatpush1.xpose.msra.mxu0 %v1205
    %1245 = vmatprep.subr.mxu0 0.0
    %1246 = vmatpush1.xpose.msra.mxu0 %v1208
    %1247 = vmatprep.subr.mxu0 0.0
    %1248 = vmatpush1.xpose.msra.mxu0 %v1211
    %1249 = vmatprep.subr.mxu0 0.0
    %1250 = vmatpush1.xpose.msra.mxu0 %v1214
    %1251 = vmatprep.subr.mxu0 0.0
    %1252 = vmatpush1.xpose.msra.mxu0 %v1217
    %1253 = vmatprep.subr.mxu0 0.0
    %1254 = vmatpush1.xpose.msra.mxu0 %v1220
    %1255 = vmatprep.subr.mxu0 0.0
    %1256 = vmatpush1.xpose.msra.mxu0 %v1223
    %1257 = vmatprep.subr.mxu0 0.0
    %1258 = vmatpush1.xpose.msra.mxu0 0.0
    %1259 = vmatprep.subr.mxu0 0.0
    %1260 = vmatpush1.xpose.msra.mxu0 0.0
    %1261 = vmatprep.subr.mxu0 0.0
    %1262 = vmatpush1.xpose.msra.mxu0 0.0
    %1263 = vmatprep.subr.mxu0 0.0
    %1264 = vmatpush1.xpose.msra.mxu0 0.0
    %1265 = vmatprep.subr.mxu0 0.0
    %1266 = vmatpush1.xpose.msra.mxu0 0.0
    %1267 = vmatprep.subr.mxu0 0.0
    %1268 = vmatpush1.xpose.msra.mxu0 0.0
    %1269 = vmatprep.subr.mxu0 0.0
    %1270 = vmatpush1.xpose.msra.mxu0 0.0
    %1271 = vmatprep.subr.mxu0 0.0
    %1272 = vmatpush1.xpose.msra.mxu0 0.0
    %1273 = vmatprep.subr.mxu0 0.0
    %1274 = vmatpush1.xpose.msra.mxu0 0.0
    %1275 = vmatprep.subr.mxu0 0.0
    %1276 = vmatpush1.xpose.msra.mxu0 0.0
    %1277 = vmatprep.subr.mxu0 0.0
    %1278 = vmatpush1.xpose.msra.mxu0 0.0
    %1279 = vmatprep.subr.mxu0 0.0
    %1280 = vmatpush1.xpose.msra.mxu0 0.0
    %1281 = vmatprep.subr.mxu0 0.0
    %1282 = vmatpush1.xpose.msra.mxu0 0.0
    %1283 = vmatprep.subr.mxu0 0.0
    %1284 = vmatpush1.xpose.msra.mxu0 0.0
    %1285 = vmatprep.subr.mxu0 0.0
    %1286 = vmatpush1.xpose.msra.mxu0 0.0
    %1287 = vmatprep.subr.mxu0 0.0
    %1288 = vmatpush1.xpose.msra.mxu0 0.0
    %1289 = vmatprep.mubr.f32.mxu0 0.0
    %1290 = vmatmul.mubr.f32.gmra.mrb[0].mxu0 %v1175
    %v1291 = vpop.f32.mrb[0].mxu0
    %v1292 = vadd.f32 0.0, %v1291
    %v1293 = vpop.f32.mrb[0].mxu0
    %1294 = vdwg.mxu0
    %1295 = vst [vmem:[#allocation2] sm:$0x1] %v1292
    // Predicated region
    $region26: #{model_forward.1} parent=1 // pred_check
      _
    $region27: #{model_forward.1} parent=1 // pred_check_branch
      %1297 = sbr.rel (0) target = $region29
    $region28: #{model_forward.1} parent=1 // pred_region
      %s1299 = ssub.s32 16, 16
      %1300 = vsyncadd [#allocation3], %s1299
      %s1302 = sshll.u32 [#allocation2], 4
      %s1303 = int_to_ptr.vmem [resolvable:$true] %s1302
      %1305 = dma.vmem_to_hbm [thread:$0]  %s1303, 16, %s6, [#allocation3]
    $region29: #{model_forward.1} parent=1 // pred_fallthru
      _
    // Predicated region
    $region30: #{model_forward.1} parent=1 // pred_check
      _
    $region31: #{model_forward.1} parent=1 // pred_check_branch
      %1307 = sbr.rel (0) target = $region33
    $region32: #{model_forward.1} parent=1 // pred_region
      %1308 = dma.done [#allocation3], 16
    $region33: #{model_forward.1} parent=1 // pred_fallthru
      _
    %1309 = vsyncpa [#allocation3], 1

</llo_original>
